<compile_context>
chip_gen: v7x
topology: tpu7x:2x2x1
jax: 0.10.0
libtpu: 0.0.40
codegen_flags: <defaults>
</compile_context>

<pallas_src>
import numpy as np

import jax
import jax.numpy as jnp
from jax.experimental import pallas as pl
from jax.experimental.pallas import tpu as pltpu


_TARGET_BLOCK_BYTES = 4 * 1024 * 1024  # ~4 MiB per input block (safe on v7x's 64 MiB VMEM)


def _pe_add_kernel(x_ref, pe_ref, o_ref):
    # x_ref : (Nb, Ct, HWp)  -- Nb batch images, Ct channels, lane-dense spatial dim
    # pe_ref: (Ct, HWp)      -- positional-encoding tile, broadcast over Nb
    # o_ref : (Nb, Ct, HWp)
    o_ref[...] = x_ref[...] + pe_ref[...]


def _largest_divisor_at_most(n, cap, multiple_of=1):
    """Largest d with d | n, d <= cap, d % multiple_of == 0 (None if none exists)."""
    best = None
    for d in range(1, min(n, cap) + 1):
        if n % d == 0 and d % multiple_of == 0:
            best = d
    return best


def create_positional_encoding(channels, height, width, group_size=64):
    """Exact replica of PositionalEncoding2D.create_positional_encoding (NumPy)."""
    assert channels % group_size == 0, "Channels must be divisible by the group size"
    assert channels % 2 == 0
    pe = np.zeros((channels, height, width), dtype=np.float32)
    # Channel-index offset for every channel.
    for group_start in range(0, channels, group_size):
        for i in range(group_start, group_start + group_size):
            pe[i, :, :] += i
    d_model = group_size // 2
    div_term = np.exp(
        np.arange(0, d_model, 2, dtype=np.float32) * -(np.log(10000.0) / d_model)
    ).astype(np.float32)
    pos_y = np.tile(np.arange(0, height, dtype=np.float32)[:, None], (1, width))
    pos_x = np.tile(np.arange(0, width, dtype=np.float32)[None, :], (height, 1))
    for i in range(0, d_model, 2):
        pe[i, :, :] += np.sin(pos_y * div_term[i // 2])
        pe[i + 1, :, :] += np.cos(pos_y * div_term[i // 2])
    for i in range(d_model, group_size, 2):
        pe[i, :, :] += np.sin(pos_x * div_term[i // 2 - d_model // 2])
        pe[i + 1, :, :] += np.cos(pos_x * div_term[i // 2 - d_model // 2])
    # Later groups are overwritten with a copy of the first group (as in the PyTorch spec).
    for group_start in range(group_size, channels, group_size):
        pe[group_start:group_start + group_size, :, :] = pe[0:group_size, :, :]
    return pe[None]  # (1, C, H, W)


def positional_encoding_2d_add(x_nchw, pe_1chw):
    """x_nchw: (N, C, H, W); pe_1chw: (1, C, H, W).
       Returns x + pe (broadcast over N), computed by a Pallas TPU kernel."""
    N, C, H, W = x_nchw.shape
    assert pe_1chw.shape == (1, C, H, W)
    dtype = x_nchw.dtype
    itemsize = np.dtype(dtype).itemsize

    # Flatten spatial dims -> lane dim = H*W (free reshape, stays NCHW order).
    # Guard lane density: pad the lane dim to a multiple of 128 if needed so stores
    # are full-width (unmasked) vector stores.  No-op for the common H*W % 128 == 0.
    HW = H * W
    pad = (-HW) % 128
    HWp = HW + pad
    x_flat = x_nchw.reshape(N, C, HW)
    pe_flat = pe_1chw.reshape(C, HW).astype(dtype)  # PE dtype tracks activation dtype
    if pad:
        x_flat = jnp.pad(x_flat, ((0, 0), (0, 0), (0, pad)))
        pe_flat = jnp.pad(pe_flat, ((0, 0), (0, pad)))

    # --- block sizing --------------------------------------------------------
    bytes_per_image = C * HWp * itemsize
    sublane = 8 * max(1, 4 // itemsize)  # f32: 8, bf16: 16, int8/fp8: 32

    if bytes_per_image <= _TARGET_BLOCK_BYTES:
        # One image fits: cover several images per step (bigger DMAs), but keep
        # >=2 (>=4 when possible) parallel grid points so both v7x TCs get work.
        min_grid = 4 if N >= 4 else (2 if N >= 2 else 1)
        nb_cap = max(1, min(_TARGET_BLOCK_BYTES // bytes_per_image, N // min_grid))
        Nb = _largest_divisor_at_most(N, nb_cap) or 1
        Ct = C
    else:
        # A single image exceeds the target block: tile the channel axis too.
        Nb = 1
        ct_cap = max(1, _TARGET_BLOCK_BYTES // (HWp * itemsize))
        Ct = _largest_divisor_at_most(C, ct_cap, multiple_of=sublane) or C

    # Channel tiles on the OUTER axis -> the PE block index is constant across all
    # inner batch steps, so it is DMA'd only once per channel tile.
    grid = (C // Ct, N // Nb)

    block_bytes = Nb * Ct * HWp * itemsize
    pe_block_bytes = Ct * HWp * itemsize
    # x + out double-buffered, PE (default 2-deep) + headroom.  Raised explicitly so
    # larger blocks fit v5e's 16 MiB scoped default; capped for v7x's 64 MiB VMEM.
    vmem_limit = int(min(max(4 * block_bytes + 2 * pe_block_bytes + (2 << 20), 32 << 20),
                         64 << 20))

    out_flat = pl.pallas_call(
        _pe_add_kernel,
        out_shape=jax.ShapeDtypeStruct((N, C, HWp), dtype),
        grid_spec=pltpu.PrefetchScalarGridSpec(
            num_scalar_prefetch=0,
            grid=grid,
            in_specs=[
                pl.BlockSpec((Nb, Ct, HWp), lambda c, n: (n, c, 0)),  # x tile
                pl.BlockSpec((Ct, HWp), lambda c, n: (c, 0)),         # PE tile (resident)
            ],
            out_specs=pl.BlockSpec((Nb, Ct, HWp), lambda c, n: (n, c, 0)),
        ),
        compiler_params=pltpu.CompilerParams(
            dimension_semantics=("parallel", "parallel"),
            vmem_limit_bytes=vmem_limit,
        ),
    )(x_flat, pe_flat)

    if pad:
        out_flat = out_flat[:, :, :HW]
    return out_flat.reshape(N, C, H, W)


class PositionalEncoding2D:
    """JAX/Pallas counterpart of the PyTorch module (forward pass only)."""

    def __init__(self, channels, height, width, group_size=64):
        assert channels % group_size == 0, "Channels must be divisible by the group size"
        self.height = height
        self.width = width
        self.channels = channels
        self.group_size = group_size
        self.positional_encoding = jnp.asarray(
            create_positional_encoding(channels, height, width, group_size))

    def __call__(self, x):
        pe = self.positional_encoding
        if pe.dtype != x.dtype:
            pe = pe.astype(x.dtype)  # keep a bf16 activation path fully bf16
        return positional_encoding_2d_add(x, pe)


if __name__ == "__main__":
    # Shapes consistent with the module: default group_size=64 forces channels to be
    # a multiple of 64; batch=2, spatial=16x16.
    N, C, H, W = 2, 64, 16, 16
    group_size = 64

    k1, k2 = jax.random.split(jax.random.PRNGKey(0))
    x = jax.random.normal(k1, (N, C, H, W), dtype=jnp.float32)

    module = PositionalEncoding2D(C, H, W, group_size=group_size)
    out = jax.block_until_ready(module(x))

    # Pure-JAX reference mirroring the PyTorch forward: x + pe (broadcast over batch).
    ref = x + module.positional_encoding
    assert out.shape == (N, C, H, W), out.shape
    assert jnp.allclose(out, ref, atol=1e-5, rtol=1e-5), float(jnp.abs(out - ref).max())

    # Secondary check: batch large enough that each grid step covers several images
    # (exercises the Nb > 1 broadcast path and the multi-point parallel grid).
    x2 = jax.random.normal(k2, (8, C, H, W), dtype=jnp.float32)
    out2 = jax.block_until_ready(module(x2))
    ref2 = x2 + module.positional_encoding
    assert jnp.allclose(out2, ref2, atol=1e-5, rtol=1e-5), float(jnp.abs(out2 - ref2).max())

    print("KERNEL_OK")
</pallas_src>

<mosaic_0001>
module attributes {stable_mosaic.version = 11 : i64} {
  func.func @_pe_add_kernel(%arg0: i32, %arg1: i32, %arg2: memref<1x64x256xf32, #tpu.memory_space<vmem>>, %arg3: memref<64x256xf32, #tpu.memory_space<vmem>>, %arg4: memref<1x64x256xf32, #tpu.memory_space<vmem>>) attributes {dimension_semantics = [#tpu.dimension_semantics<parallel>, #tpu.dimension_semantics<parallel>], iteration_bounds = array<i64: 1, 2>, scalar_prefetch = 0 : i64, scratch_operands = 0 : i64, tpu.core_type = #tpu.core_type<tc>, window_params = [{transform_indices = @transform_0, window_bounds = array<i64: 1, 64, 256>}, {transform_indices = @transform_1, window_bounds = array<i64: 64, 256>}, {transform_indices = @transform_2, window_bounds = array<i64: 1, 64, 256>}]} {
    %c0 = arith.constant 0 : index
    %c0_0 = arith.constant 0 : index
    %c0_1 = arith.constant 0 : index
    %0 = vector.load %arg2[%c0, %c0_0, %c0_1] : memref<1x64x256xf32, #tpu.memory_space<vmem>>, vector<1x64x256xf32>
    %c0_2 = arith.constant 0 : index
    %c0_3 = arith.constant 0 : index
    %1 = vector.load %arg3[%c0_2, %c0_3] : memref<64x256xf32, #tpu.memory_space<vmem>>, vector<64x256xf32>
    %2 = vector.shape_cast %1 : vector<64x256xf32> to vector<1x64x256xf32>
    %3 = arith.addf %0, %2 : vector<1x64x256xf32>
    %c0_4 = arith.constant 0 : index
    %c0_5 = arith.constant 0 : index
    %c0_6 = arith.constant 0 : index
    %4 = vector.load %arg4[%c0_4, %c0_5, %c0_6] : memref<1x64x256xf32, #tpu.memory_space<vmem>>, vector<1x64x256xf32>
    tpu.vector_store %arg4[%c0_4, %c0_5, %c0_6], %3 {strides = array<i32>} : memref<1x64x256xf32, #tpu.memory_space<vmem>>, vector<1x64x256xf32>,
    return
  }
  func.func @transform_0(%arg0: i32, %arg1: i32) -> (i32, i32, i32) {
    %c0_i32 = arith.constant 0 : i32
    %c0_i32_0 = arith.constant 0 : i32
    return %arg1, %arg0, %c0_i32 : i32, i32, i32
  }
  func.func @transform_1(%arg0: i32, %arg1: i32) -> (i32, i32) {
    %c0_i32 = arith.constant 0 : i32
    %c0_i32_0 = arith.constant 0 : i32
    return %arg0, %c0_i32 : i32, i32
  }
  func.func @transform_2(%arg0: i32, %arg1: i32) -> (i32, i32, i32) {
    %c0_i32 = arith.constant 0 : i32
    %c0_i32_0 = arith.constant 0 : i32
    return %arg1, %arg0, %c0_i32 : i32, i32, i32
  }
}

</mosaic_0001>

<llo_original>
// kernel: tpu_custom_call.1
$region0: #{tpu_custom_call.1}
  #allocation0 [shape = 'u32[]', space=smem, size = 0x4, offset = 0x4, fixed_abs, tag = 'smem constant byte address 0x4 - core index']
  #allocation1 [shape = 'u32[144,128]{1,0:T(1,128)}', space=vmem, size = 0x12000, scoped, tag = 'internal scratch']
  %s0 = inlined_call_operand.hbm [shape: f32[2,64,256], index: 0, kind: input, shape index: {}]
  %s1 = inlined_call_operand.hbm [shape: f32[64,256], index: 1, kind: input, shape index: {}]
  %s2 = inlined_call_operand.hbm [shape: f32[2,64,256], index: 2, kind: output, shape index: {}]
  %s3 = sld [smem:[#allocation0]]
  $region49: #{tpu_custom_call.1} parent=0
    _
  %s5 = ssub.s32 1, %s3
  %s6 = scalar_select 0, %s5, %s3
  $region1: #{tpu_custom_call.1} parent=0
    #allocation2 [shape = 'u8[131072]{0}', space=vmem, size = 0x20000, scoped, tag = 'input window, operand 0']
    #allocation3 [shape = 's32[2]{0}', space=sflag, size = 0x8, scoped, tag = 'scoped memory for tpu_custom_call.1']
    #allocation4 [shape = 's32[2]{0}', space=sflag, size = 0x8, scoped, tag = 'scoped memory for tpu_custom_call.1']
    #allocation5 [shape = 'u8[65536]{0}', space=vmem, size = 0x10000, scoped, tag = 'input window, operand 1, single buffered']
    #allocation6 [shape = 's32[1]{0}', space=sflag, size = 0x4, scoped, tag = 'scoped memory for tpu_custom_call.1']
    #allocation7 [shape = 'u8[131072]{0}', space=vmem, size = 0x20000, scoped, tag = 'output window, operand 0']
    %7 = vsyncpa [#allocation3], 0
    %s8 = scalar_lea.sflag [#allocation3], 1
    %9 = vsyncpa %s8, 0
    %10 = vsyncpa [#allocation6], 0
    %11 = vsyncpa [#allocation4], 0
    %s12 = scalar_lea.sflag [#allocation4], 1
    %13 = vsyncpa %s12, 0
    loop: start=0, step=1, limit=4
    $region2: #{tpu_custom_call.1} parent=1 // loop_pre_header
      _
    $region3: #{tpu_custom_call.1} parent=1 // loop_header
      %s15 = sphi 0, %s19
      %p16 = scmp.ge.s32.totalorder %s15, 4
      %s22 = sphi 0, %s34
      %s23 = sphi 0, %s30
      %s24 = sphi 0, %s22
      %s25 = sphi 0, %s23
      %s26 = sphi 0, %s24
      %s27 = sphi 0, %s25
      %s39 = sphi 0, %s41
      %s42 = sphi 0, %s39
      %s43 = sphi 0, %s42
      %s59 = sphi 0, %s43
      %s65 = sphi 0, %s67
      %s68 = sphi 0, %s65
      %s69 = sphi 0, %s68
      %s85 = sphi 0, %s69
      %s93 = sphi 0, %s95
      %s96 = sphi 0, %s93
      %s97 = sphi 0, %s96
      %s113 = sphi 0, %s97
    $region4: #{tpu_custom_call.1} parent=1 // loop_header_branch
      %18 = sbr.rel (%p16) target = $region8
    $region5: #{tpu_custom_call.1} parent=1 // loop_body
      %s20 = ssub.s32 %s15, 1
      %s21 = ssub.s32 %s15, 2
      %s28 = sadd.s32 1, %s23
      %p29 = scmp.ge.s32.totalorder %s28, 2
      %s30 = scalar_select %p29, 0, %s28
      %s31 = sadd.s32 1, %s22
      %s32 = scalar_select %p29, %s31, %s22
      %p33 = scmp.ge.s32.totalorder %s32, 1
      %s34 = scalar_select %p33, 0, %s32
      %s35 = ssub.s32 %s23, %s30
      %s36 = ssub.s32 %s22, %s34
      %s37 = sor.u32 %s35, %s36
      %p38 = scmp.eq.s32.totalorder %s37, 0
      %s40 = sadd.s32 %s39, 1
      %s41 = scalar_select %p38, %s39, %s40
      %p44 = pneg %p38
      %p45 = scmp.eq.s32.totalorder %s15, 1
      %p46 = por %p44, %p45
      %p47 = scmp.ne.s32.totalorder %s39, %s42
      %p48 = scmp.eq.s32.totalorder %s15, 0
      %p49 = por %p47, %p48
      %p50 = scmp.ne.s32.totalorder %s39, %s42
      %p51 = scmp.eq.s32.totalorder %s20, 1
      %p52 = por %p50, %p51
      %p53 = scmp.ne.s32.totalorder %s42, %s43
      %p54 = scmp.eq.s32.totalorder %s20, 0
      %p55 = por %p53, %p54
      %p56 = scmp.ne.s32.totalorder %s42, %s43
      %p57 = scmp.eq.s32.totalorder %s21, 1
      %p58 = por %p56, %p57
      %p60 = scmp.ne.s32.totalorder %s43, %s59
      %p61 = scmp.eq.s32.totalorder %s21, 0
      %p62 = por %p60, %p61
      %s63 = ssub.s32 %s22, %s34
      %p64 = scmp.eq.s32.totalorder %s63, 0
      %s66 = sadd.s32 %s65, 1
      %s67 = scalar_select %p64, %s65, %s66
      %p70 = pneg %p64
      %p71 = scmp.eq.s32.totalorder %s15, 1
      %p72 = por %p70, %p71
      %p73 = scmp.ne.s32.totalorder %s65, %s68
      %p74 = scmp.eq.s32.totalorder %s15, 0
      %p75 = por %p73, %p74
      %p76 = scmp.ne.s32.totalorder %s65, %s68
      %p77 = scmp.eq.s32.totalorder %s20, 1
      %p78 = por %p76, %p77
      %p79 = scmp.ne.s32.totalorder %s68, %s69
      %p80 = scmp.eq.s32.totalorder %s20, 0
      %p81 = por %p79, %p80
      %p82 = scmp.ne.s32.totalorder %s68, %s69
      %p83 = scmp.eq.s32.totalorder %s21, 1
      %p84 = por %p82, %p83
      %p86 = scmp.ne.s32.totalorder %s69, %s85
      %p87 = scmp.eq.s32.totalorder %s21, 0
      %p88 = por %p86, %p87
      %s89 = ssub.s32 %s23, %s30
      %s90 = ssub.s32 %s22, %s34
      %s91 = sor.u32 %s89, %s90
      %p92 = scmp.eq.s32.totalorder %s91, 0
      %s94 = sadd.s32 %s93, 1
      %s95 = scalar_select %p92, %s93, %s94
      %p98 = pneg %p92
      %p99 = scmp.eq.s32.totalorder %s15, 1
      %p100 = por %p98, %p99
      %p101 = scmp.ne.s32.totalorder %s93, %s96
      %p102 = scmp.eq.s32.totalorder %s15, 0
      %p103 = por %p101, %p102
      %p104 = scmp.ne.s32.totalorder %s93, %s96
      %p105 = scmp.eq.s32.totalorder %s20, 1
      %p106 = por %p104, %p105
      %p107 = scmp.ne.s32.totalorder %s96, %s97
      %p108 = scmp.eq.s32.totalorder %s20, 0
      %p109 = por %p107, %p108
      %p110 = scmp.ne.s32.totalorder %s96, %s97
      %p111 = scmp.eq.s32.totalorder %s21, 1
      %p112 = por %p110, %p111
      %p114 = scmp.ne.s32.totalorder %s97, %s113
      %p115 = scmp.eq.s32.totalorder %s21, 0
      %p116 = por %p114, %p115
      %p117 = scmp.le.s32.totalorder 1, %s15
      %p118 = scmp.lt.s32.totalorder %s15, 3
      %p119 = pnand %p117, %p118
      %p120 = pneg %p119
      // Predicated region
      $region9: #{tpu_custom_call.1} parent=5 // pred_check
        _
      $region10: #{tpu_custom_call.1} parent=5 // pred_check_branch
        %122 = sbr.rel (%p119) target = $region12
      $region11: #{tpu_custom_call.1} parent=5 // pred_region
        %s123 = ssub.s32 %s15, 1
        // Predicated region
        $region13: #{tpu_custom_call.1} parent=11 // pred_check
          %p124 = pneg %p81
        $region14: #{tpu_custom_call.1} parent=11 // pred_check_branch
          %126 = sbr.rel (%p124) target = $region16
        $region15: #{tpu_custom_call.1} parent=11 // pred_region
          %s127 = smul.u32 8, %s24
          %s129 = ssub.s32 2048, 2048
          %130 = vsyncadd [#allocation6], %s129
          %s131 = smul.addr %s127, 2
          %s132 = smul.addr %s131, 128
          %s133 = scalar_lea.hbm %s1, %s132
          %s134 = sshll.u32 [#allocation5], 4
          %s135 = int_to_ptr.vmem [resolvable:$true] %s134
          %140 = dma.hbm_to_vmem [thread:$0]  %s133, 2048, %s135, [#allocation6], 256, 256, 16
        $region16: #{tpu_custom_call.1} parent=11 // pred_fallthru
          _
      $region12: #{tpu_custom_call.1} parent=5 // pred_fallthru
        _
      %p141 = scmp.lt.s32.totalorder %s15, 2
      // Predicated region
      $region17: #{tpu_custom_call.1} parent=5 // pred_check
        %p142 = pneg %p141
      $region18: #{tpu_custom_call.1} parent=5 // pred_check_branch
        %144 = sbr.rel (%p142) target = $region20
      $region19: #{tpu_custom_call.1} parent=5 // pred_region
        // Predicated region
        $region21: #{tpu_custom_call.1} parent=19 // pred_check
          %p145 = pneg %p49
        $region22: #{tpu_custom_call.1} parent=19 // pred_check_branch
          %147 = sbr.rel (%p145) target = $region24
        $region23: #{tpu_custom_call.1} parent=19 // pred_region
          %s148 = sand.u32 %s39, 1
          %s149 = scalar_lea.sflag [#allocation3], %s148
          %s150 = sand.u32 %s39, 1
          %s151 = smul.addr %s150, 128
          %s152 = scalar_lea.vmem [#allocation2], %s151
          %s153 = smul.u32 8, %s22
          %s155 = ssub.s32 2048, 2048
          %156 = vsyncadd %s149, %s155
          %s157 = smul.addr %s153, 2
          %s158 = smul.addr %s23, 16
          %s159 = sadd.s32 %s157, %s158
          %s160 = smul.addr %s159, 128
          %s161 = scalar_lea.hbm %s0, %s160
          %s162 = sshll.u32 %s152, 4
          %s163 = int_to_ptr.vmem [resolvable:$true] %s162
          %168 = dma.hbm_to_vmem [thread:$0]  %s161, 2048, %s163, %s149, 256, 256, 16
        $region24: #{tpu_custom_call.1} parent=19 // pred_fallthru
          _
      $region20: #{tpu_custom_call.1} parent=5 // pred_fallthru
        _
      %p169 = scmp.le.s32.totalorder 1, %s15
      %p170 = scmp.lt.s32.totalorder %s15, 3
      %p171 = pnand %p169, %p170
      %p172 = pneg %p171
      // Predicated region
      $region25: #{tpu_custom_call.1} parent=5 // pred_check
        _
      $region26: #{tpu_custom_call.1} parent=5 // pred_check_branch
        %174 = sbr.rel (%p171) target = $region28
      $region27: #{tpu_custom_call.1} parent=5 // pred_region
        %s175 = ssub.s32 %s15, 1
        %s176 = sand.u32 %s42, 1
        %s177 = scalar_lea.sflag [#allocation3], %s176
        %s178 = sand.u32 %s42, 1
        %s179 = smul.addr %s178, 128
        %s180 = scalar_lea.vmem [#allocation2], %s179
        // Predicated region
        $region29: #{tpu_custom_call.1} parent=27 // pred_check
          %p181 = pneg %p55
        $region30: #{tpu_custom_call.1} parent=27 // pred_check_branch
          %183 = sbr.rel (%p181) target = $region32
        $region31: #{tpu_custom_call.1} parent=27 // pred_region
          %184 = dma.done %s177, 2048
        $region32: #{tpu_custom_call.1} parent=27 // pred_fallthru
          _
        // Predicated region
        $region33: #{tpu_custom_call.1} parent=27 // pred_check
          %p185 = pneg %p81
        $region34: #{tpu_custom_call.1} parent=27 // pred_check_branch
          %187 = sbr.rel (%p185) target = $region36
        $region35: #{tpu_custom_call.1} parent=27 // pred_region
          %188 = dma.done [#allocation6], 2048
        $region36: #{tpu_custom_call.1} parent=27 // pred_fallthru
          _
        %s189 = sand.u32 %s42, 1
        %s190 = scalar_lea.sflag [#allocation3], %s189
        %s191 = sand.u32 %s42, 1
        %s192 = smul.addr %s191, 128
        %s193 = scalar_lea.vmem [#allocation2], %s192
        %p194 = pneg %p55
        %p195 = pneg %p52
        %p196 = pneg %p81
        %p197 = pneg %p78
        %p198 = pneg %p109
        %p199 = pneg %p106
        %s200 = sand.u32 %s96, 1
        %s201 = scalar_lea.sflag [#allocation4], %s200
        %s202 = sand.u32 %s96, 1
        %s203 = smul.addr %s202, 128
        %s204 = scalar_lea.vmem [#allocation7], %s203
        %s205 = smul.u32 8, %s24
        %s206 = smul.u32 8, %s24
        %s207 = smul.u32 8, %s24
        %v208 = vld [vmem:[%s180] sm:$0xff]
        %v209 = vld [vmem:[%s180 + $0x8] sm:$0xff]
        %v210 = vld [vmem:[%s180 + $0x10] sm:$0xff]
        %v211 = vld [vmem:[%s180 + $0x18] sm:$0xff]
        %v212 = vld [vmem:[%s180 + $0x20] sm:$0xff]
        %v213 = vld [vmem:[%s180 + $0x28] sm:$0xff]
        %v214 = vld [vmem:[%s180 + $0x30] sm:$0xff]
        %v215 = vld [vmem:[%s180 + $0x38] sm:$0xff]
        %v216 = vld [vmem:[%s180 + $0x40] sm:$0xff]
        %v217 = vld [vmem:[%s180 + $0x48] sm:$0xff]
        %v218 = vld [vmem:[%s180 + $0x50] sm:$0xff]
        %v219 = vld [vmem:[%s180 + $0x58] sm:$0xff]
        %v220 = vld [vmem:[%s180 + $0x60] sm:$0xff]
        %v221 = vld [vmem:[%s180 + $0x68] sm:$0xff]
        %v222 = vld [vmem:[%s180 + $0x70] sm:$0xff]
        %v223 = vld [vmem:[%s180 + $0x78] sm:$0xff]
        %v224 = vld [vmem:[#allocation5] sm:$0xff]
        %v225 = vld [vmem:[#allocation5 + $0x8] sm:$0xff]
        %v226 = vld [vmem:[#allocation5 + $0x10] sm:$0xff]
        %v227 = vld [vmem:[#allocation5 + $0x18] sm:$0xff]
        %v228 = vld [vmem:[#allocation5 + $0x20] sm:$0xff]
        %v229 = vld [vmem:[#allocation5 + $0x28] sm:$0xff]
        %v230 = vld [vmem:[#allocation5 + $0x30] sm:$0xff]
        %v231 = vld [vmem:[#allocation5 + $0x38] sm:$0xff]
        %v232 = vld [vmem:[#allocation5 + $0x40] sm:$0xff]
        %v233 = vld [vmem:[#allocation5 + $0x48] sm:$0xff]
        %v234 = vld [vmem:[#allocation5 + $0x50] sm:$0xff]
        %v235 = vld [vmem:[#allocation5 + $0x58] sm:$0xff]
        %v236 = vld [vmem:[#allocation5 + $0x60] sm:$0xff]
        %v237 = vld [vmem:[#allocation5 + $0x68] sm:$0xff]
        %v238 = vld [vmem:[#allocation5 + $0x70] sm:$0xff]
        %v239 = vld [vmem:[#allocation5 + $0x78] sm:$0xff]
        %v240 = vadd.f32 %v208, %v224
        %v241 = vadd.f32 %v209, %v225
        %v242 = vadd.f32 %v210, %v226
        %v243 = vadd.f32 %v211, %v227
        %v244 = vadd.f32 %v212, %v228
        %v245 = vadd.f32 %v213, %v229
        %v246 = vadd.f32 %v214, %v230
        %v247 = vadd.f32 %v215, %v231
        %v248 = vadd.f32 %v216, %v232
        %v249 = vadd.f32 %v217, %v233
        %v250 = vadd.f32 %v218, %v234
        %v251 = vadd.f32 %v219, %v235
        %v252 = vadd.f32 %v220, %v236
        %v253 = vadd.f32 %v221, %v237
        %v254 = vadd.f32 %v222, %v238
        %v255 = vadd.f32 %v223, %v239
        %256 = vst [vmem:[%s204] sm:$0xff] %v240
        %257 = vst [vmem:[%s204 + $0x8] sm:$0xff] %v241
        %258 = vst [vmem:[%s204 + $0x10] sm:$0xff] %v242
        %259 = vst [vmem:[%s204 + $0x18] sm:$0xff] %v243
        %260 = vst [vmem:[%s204 + $0x20] sm:$0xff] %v244
        %261 = vst [vmem:[%s204 + $0x28] sm:$0xff] %v245
        %262 = vst [vmem:[%s204 + $0x30] sm:$0xff] %v246
        %263 = vst [vmem:[%s204 + $0x38] sm:$0xff] %v247
        %264 = vst [vmem:[%s204 + $0x40] sm:$0xff] %v248
        %265 = vst [vmem:[%s204 + $0x48] sm:$0xff] %v249
        %266 = vst [vmem:[%s204 + $0x50] sm:$0xff] %v250
        %267 = vst [vmem:[%s204 + $0x58] sm:$0xff] %v251
        %268 = vst [vmem:[%s204 + $0x60] sm:$0xff] %v252
        %269 = vst [vmem:[%s204 + $0x68] sm:$0xff] %v253
        %270 = vst [vmem:[%s204 + $0x70] sm:$0xff] %v254
        %271 = vst [vmem:[%s204 + $0x78] sm:$0xff] %v255
        %s272 = sand.u32 %s96, 1
        %s273 = scalar_lea.sflag [#allocation4], %s272
        %s274 = sand.u32 %s96, 1
        %s275 = smul.addr %s274, 128
        %s276 = scalar_lea.vmem [#allocation7], %s275
        // Predicated region
        $region37: #{tpu_custom_call.1} parent=27 // pred_check
          %p277 = pneg %p106
        $region38: #{tpu_custom_call.1} parent=27 // pred_check_branch
          %279 = sbr.rel (%p277) target = $region40
        $region39: #{tpu_custom_call.1} parent=27 // pred_region
          %s280 = smul.u32 8, %s24
          %s282 = ssub.s32 2048, 2048
          %283 = vsyncadd %s273, %s282
          %s284 = smul.addr %s280, 2
          %s285 = smul.addr %s25, 16
          %s286 = sadd.s32 %s284, %s285
          %s287 = smul.addr %s286, 128
          %s288 = scalar_lea.hbm %s2, %s287
          %s289 = sshll.u32 %s276, 4
          %s290 = int_to_ptr.vmem [resolvable:$true] %s289
          %295 = dma.vmem_to_hbm [thread:$0]  %s290, 2048, %s288, %s273, 256, 256, 16
        $region40: #{tpu_custom_call.1} parent=27 // pred_fallthru
          _
      $region28: #{tpu_custom_call.1} parent=5 // pred_fallthru
        _
      %p296 = scmp.le.s32.totalorder 2, %s15
      // Predicated region
      $region41: #{tpu_custom_call.1} parent=5 // pred_check
        %p297 = pneg %p296
      $region42: #{tpu_custom_call.1} parent=5 // pred_check_branch
        %299 = sbr.rel (%p297) target = $region44
      $region43: #{tpu_custom_call.1} parent=5 // pred_region
        %s300 = ssub.s32 %s15, 2
        // Predicated region
        $region45: #{tpu_custom_call.1} parent=43 // pred_check
          %p301 = pneg %p112
        $region46: #{tpu_custom_call.1} parent=43 // pred_check_branch
          %303 = sbr.rel (%p301) target = $region48
        $region47: #{tpu_custom_call.1} parent=43 // pred_region
          %s304 = sand.u32 %s97, 1
          %s305 = scalar_lea.sflag [#allocation4], %s304
          %s306 = sand.u32 %s97, 1
          %s307 = smul.addr %s306, 128
          %s308 = scalar_lea.vmem [#allocation7], %s307
          %309 = dma.done %s305, 2048
        $region48: #{tpu_custom_call.1} parent=43 // pred_fallthru
          _
      $region44: #{tpu_custom_call.1} parent=5 // pred_fallthru
        _
    $region6: #{tpu_custom_call.1} parent=1 // loop_footer
      %s19 = sadd.s32 1, %s15
    $region7: #{tpu_custom_call.1} parent=1 // loop_footer_branch
      %14 = sbr.rel target = $region3
    $region8: #{tpu_custom_call.1} parent=1 // loop_exit
      _
    %310 = vsyncpa [#allocation3], 1
    %s311 = scalar_lea.sflag [#allocation3], 1
    %312 = vsyncpa %s311, 1
    %313 = vsyncpa [#allocation6], 1
    %314 = vsyncpa [#allocation4], 1
    %s315 = scalar_lea.sflag [#allocation4], 1
    %316 = vsyncpa %s315, 1

</llo_original>
